<compile_context>
chip_gen: v7x
topology: tpu7x:2x2x1
jax: 0.10.0
libtpu: 0.0.40
codegen_flags: <defaults>
</compile_context>

<pallas_src>
import jax
import jax.numpy as jnp
from jax.experimental import pallas as pl
from jax.experimental.pallas import tpu as pltpu

_LANE = 128


def _softmax_kernel(x_ref, o_ref):
    # x_ref / o_ref: (TILE_ROWS, W_padded) block in VMEM.
    x = x_ref[...].astype(jnp.float32)
    m = jnp.max(x, axis=-1, keepdims=True)
    e = jnp.exp(x - m)                 # x is dead after this; buffer is reused
    s = jnp.sum(e, axis=-1, keepdims=True)
    # approx reciprocal lowers to the otherwise-idle EUP slot.
    o_ref[...] = (e * pl.reciprocal(s, approx=True)).astype(o_ref.dtype)


def _round_up(v, m):
    return (v + m - 1) // m * m


def _choose_tile_rows(rows, w_padded, itemsize, sublane):
    """Largest sublane-aligned row tile that fits the VMEM budget and keeps
    enough grid steps for 2-TC sharding."""
    budget = 32 * 1024 * 1024
    # 2x double-buffered (in + out) tiles in native dtype + ~2 f32 temporaries.
    bytes_per_row = 4 * w_padded * itemsize + 2 * w_padded * 4
    tr = budget // bytes_per_row
    tr = min(tr, 2048, rows)
    # Keep >= 8 grid steps (when the problem is big enough) so the "parallel"
    # grid axis can shard across v7x's 2 TensorCores and the pipeline ramps.
    min_steps = 8
    if rows >= min_steps * sublane:
        tr = min(tr, rows // min_steps)
    tr = max(sublane, (tr // sublane) * sublane)
    return tr


def softmax_last_dim(x):
    """Softmax over the last axis (matches torch.nn.functional.softmax(dim=-1))."""
    orig_shape = x.shape
    w = orig_shape[-1]
    rows = 1
    for d in orig_shape[:-1]:
        rows *= d
    x2 = x.reshape(rows, w)

    itemsize = jnp.dtype(x.dtype).itemsize
    sublane = 8 if itemsize >= 4 else (16 if itemsize == 2 else 32)

    # Lane-dense last dim: pad W to a multiple of 128 with -inf so padded
    # columns contribute exp(-inf) == 0 and stores stay unmasked.
    w_padded = _round_up(w, _LANE)
    if w_padded != w:
        x2 = jnp.pad(x2, ((0, 0), (0, w_padded - w)), constant_values=-jnp.inf)

    tr = _choose_tile_rows(rows, w_padded, itemsize, sublane)

    # Pad rows up to a multiple of the tile instead of shrinking the tile.
    rows_padded = _round_up(rows, tr)
    if rows_padded != rows:
        x2 = jnp.pad(x2, ((0, rows_padded - rows), (0, 0)))

    grid = (rows_padded // tr,)

    out = pl.pallas_call(
        _softmax_kernel,
        out_shape=jax.ShapeDtypeStruct((rows_padded, w_padded), x.dtype),
        grid_spec=pltpu.PrefetchScalarGridSpec(
            num_scalar_prefetch=0,
            grid=grid,
            in_specs=[pl.BlockSpec((tr, w_padded), lambda i: (i, 0))],
            out_specs=pl.BlockSpec((tr, w_padded), lambda i: (i, 0)),
        ),
        compiler_params=pltpu.CompilerParams(
            dimension_semantics=("parallel",),
            vmem_limit_bytes=48 * 1024 * 1024,
        ),
    )(x2)

    if rows_padded != rows or w_padded != w:
        out = out[:rows, :w]
    return out.reshape(orig_shape)


if __name__ == "__main__":
    key = jax.random.PRNGKey(0)
    # Shape from the original module: x220 = torch.randn([1, 4, 384, 384]).
    x = jax.random.normal(key, (1, 4, 384, 384), dtype=jnp.float32)

    y = softmax_last_dim(x)
    y = jax.block_until_ready(y)

    # Reference check (tolerance comfortably above approx-reciprocal error,
    # far below any algorithmic mistake).
    y_ref = jax.nn.softmax(x, axis=-1)
    assert jnp.allclose(y, y_ref, atol=1e-3, rtol=1e-3), "mismatch vs reference"
    assert jnp.allclose(jnp.sum(y, axis=-1), 1.0, atol=1e-3), "rows do not sum to 1"

    print("KERNEL_OK")
</pallas_src>

<mosaic_0001>
module attributes {stable_mosaic.version = 11 : i64} {
  func.func @_softmax_kernel(%arg0: i32, %arg1: memref<192x384xf32, #tpu.memory_space<vmem>>, %arg2: memref<192x384xf32, #tpu.memory_space<vmem>>) attributes {dimension_semantics = [#tpu.dimension_semantics<parallel>], iteration_bounds = array<i64: 8>, scalar_prefetch = 0 : i64, scratch_operands = 0 : i64, tpu.core_type = #tpu.core_type<tc>, window_params = [{transform_indices = @transform_0, window_bounds = array<i64: 192, 384>}, {transform_indices = @transform_1, window_bounds = array<i64: 192, 384>}]} {
    %c0 = arith.constant 0 : index
    %c0_0 = arith.constant 0 : index
    %0 = vector.load %arg1[%c0, %c0_0] : memref<192x384xf32, #tpu.memory_space<vmem>>, vector<192x384xf32>
    %cst = arith.constant dense<0xFF800000> : vector<192xf32>
    %1 = vector.multi_reduction <maximumf>, %0, %cst [1] : vector<192x384xf32> to vector<192xf32>
    %2 = vector.shape_cast %1 : vector<192xf32> to vector<192x1xf32>
    %3 = vector.broadcast %2 : vector<192x1xf32> to vector<192x384xf32>
    %4 = arith.subf %0, %3 : vector<192x384xf32>
    %5 = math.exp %4 : vector<192x384xf32>
    %cst_1 = arith.constant dense<0.000000e+00> : vector<192xf32>
    %6 = vector.multi_reduction <add>, %5, %cst_1 [1] : vector<192x384xf32> to vector<192xf32>
    %7 = vector.shape_cast %6 : vector<192xf32> to vector<192x1xf32>
    %8 = tpu.reciprocal %7 {approx = true} : vector<192x1xf32> -> vector<192x1xf32>
    %9 = vector.broadcast %8 : vector<192x1xf32> to vector<192x384xf32>
    %10 = arith.mulf %5, %9 : vector<192x384xf32>
    %c0_2 = arith.constant 0 : index
    %c0_3 = arith.constant 0 : index
    %11 = vector.load %arg2[%c0_2, %c0_3] : memref<192x384xf32, #tpu.memory_space<vmem>>, vector<192x384xf32>
    tpu.vector_store %arg2[%c0_2, %c0_3], %10 {strides = array<i32>} : memref<192x384xf32, #tpu.memory_space<vmem>>, vector<192x384xf32>,
    return
  }
  func.func @transform_0(%arg0: i32) -> (i32, i32) {
    %c0_i32 = arith.constant 0 : i32
    %c0_i32_0 = arith.constant 0 : i32
    return %arg0, %c0_i32 : i32, i32
  }
  func.func @transform_1(%arg0: i32) -> (i32, i32) {
    %c0_i32 = arith.constant 0 : i32
    %c0_i32_0 = arith.constant 0 : i32
    return %arg0, %c0_i32 : i32, i32
  }
}

</mosaic_0001>

<llo_original>
// kernel: tpu_custom_call.1
$region0: #{tpu_custom_call.1}
  #allocation0 [shape = 'u32[]', space=smem, size = 0x4, offset = 0x4, fixed_abs, tag = 'smem constant byte address 0x4 - core index']
  #allocation1 [shape = 'u32[144,128]{1,0:T(1,128)}', space=vmem, size = 0x12000, scoped, tag = 'internal scratch']
  %s0 = inlined_call_operand.hbm [shape: f32[1536,384], index: 0, kind: input, shape index: {}]
  %s1 = inlined_call_operand.hbm [shape: f32[1536,384], index: 1, kind: output, shape index: {}]
  %s2 = sld [smem:[#allocation0]]
  $region41: #{tpu_custom_call.1} parent=0
    _
  %s4 = ssub.s32 1, %s2
  %s5 = scalar_select 0, %s4, %s2
  $region1: #{tpu_custom_call.1} parent=0
    #allocation2 [shape = 'u8[589824]{0}', space=vmem, size = 0x90000, scoped, tag = 'input window, operand 0']
    #allocation3 [shape = 's32[2]{0}', space=sflag, size = 0x8, scoped, tag = 'scoped memory for tpu_custom_call.1']
    #allocation4 [shape = 's32[2]{0}', space=sflag, size = 0x8, scoped, tag = 'scoped memory for tpu_custom_call.1']
    #allocation5 [shape = 'u8[589824]{0}', space=vmem, size = 0x90000, scoped, tag = 'output window, operand 0']
    %6 = vsyncpa [#allocation3], 0
    %s7 = scalar_lea.sflag [#allocation3], 1
    %8 = vsyncpa %s7, 0
    %9 = vsyncpa [#allocation4], 0
    %s10 = scalar_lea.sflag [#allocation4], 1
    %11 = vsyncpa %s10, 0
    loop: start=0, step=1, limit=10
    $region2: #{tpu_custom_call.1} parent=1 // loop_pre_header
      _
    $region3: #{tpu_custom_call.1} parent=1 // loop_header
      %s13 = sphi 0, %s17
      %p14 = scmp.ge.s32.totalorder %s13, 10
      %s23 = sphi 0, %s25
      %s26 = sphi 0, %s23
      %s27 = sphi 0, %s26
      %s43 = sphi 0, %s27
      %s49 = sphi 0, %s51
      %s52 = sphi 0, %s49
      %s53 = sphi 0, %s52
      %s69 = sphi 0, %s53
    $region4: #{tpu_custom_call.1} parent=1 // loop_header_branch
      %16 = sbr.rel (%p14) target = $region8
    $region5: #{tpu_custom_call.1} parent=1 // loop_body
      %s18 = ssub.s32 %s13, 1
      %s19 = ssub.s32 %s13, 2
      %s20 = sadd.s32 %s13, 1
      %s21 = ssub.s32 %s13, %s20
      %p22 = scmp.eq.s32.totalorder %s21, 0
      %s24 = sadd.s32 %s23, 1
      %s25 = scalar_select %p22, %s23, %s24
      %p28 = pneg %p22
      %p29 = scmp.eq.s32.totalorder %s13, 7
      %p30 = por %p28, %p29
      %p31 = scmp.ne.s32.totalorder %s23, %s26
      %p32 = scmp.eq.s32.totalorder %s13, 0
      %p33 = por %p31, %p32
      %p34 = scmp.ne.s32.totalorder %s23, %s26
      %p35 = scmp.eq.s32.totalorder %s18, 7
      %p36 = por %p34, %p35
      %p37 = scmp.ne.s32.totalorder %s26, %s27
      %p38 = scmp.eq.s32.totalorder %s18, 0
      %p39 = por %p37, %p38
      %p40 = scmp.ne.s32.totalorder %s26, %s27
      %p41 = scmp.eq.s32.totalorder %s19, 7
      %p42 = por %p40, %p41
      %p44 = scmp.ne.s32.totalorder %s27, %s43
      %p45 = scmp.eq.s32.totalorder %s19, 0
      %p46 = por %p44, %p45
      %s47 = ssub.s32 %s13, %s20
      %p48 = scmp.eq.s32.totalorder %s47, 0
      %s50 = sadd.s32 %s49, 1
      %s51 = scalar_select %p48, %s49, %s50
      %p54 = pneg %p48
      %p55 = scmp.eq.s32.totalorder %s13, 7
      %p56 = por %p54, %p55
      %p57 = scmp.ne.s32.totalorder %s49, %s52
      %p58 = scmp.eq.s32.totalorder %s13, 0
      %p59 = por %p57, %p58
      %p60 = scmp.ne.s32.totalorder %s49, %s52
      %p61 = scmp.eq.s32.totalorder %s18, 7
      %p62 = por %p60, %p61
      %p63 = scmp.ne.s32.totalorder %s52, %s53
      %p64 = scmp.eq.s32.totalorder %s18, 0
      %p65 = por %p63, %p64
      %p66 = scmp.ne.s32.totalorder %s52, %s53
      %p67 = scmp.eq.s32.totalorder %s19, 7
      %p68 = por %p66, %p67
      %p70 = scmp.ne.s32.totalorder %s53, %s69
      %p71 = scmp.eq.s32.totalorder %s19, 0
      %p72 = por %p70, %p71
      %p73 = scmp.le.s32.totalorder 1, %s13
      %p74 = scmp.lt.s32.totalorder %s13, 9
      %p75 = pnand %p73, %p74
      %p76 = pneg %p75
      // Predicated region
      $region9: #{tpu_custom_call.1} parent=5 // pred_check
        _
      $region10: #{tpu_custom_call.1} parent=5 // pred_check_branch
        %78 = sbr.rel (%p75) target = $region12
      $region11: #{tpu_custom_call.1} parent=5 // pred_region
        %s79 = ssub.s32 %s13, 1
      $region12: #{tpu_custom_call.1} parent=5 // pred_fallthru
        _
      %p80 = scmp.lt.s32.totalorder %s13, 8
      // Predicated region
      $region13: #{tpu_custom_call.1} parent=5 // pred_check
        %p81 = pneg %p80
      $region14: #{tpu_custom_call.1} parent=5 // pred_check_branch
        %83 = sbr.rel (%p81) target = $region16
      $region15: #{tpu_custom_call.1} parent=5 // pred_region
        // Predicated region
        $region17: #{tpu_custom_call.1} parent=15 // pred_check
          %p84 = pneg %p33
        $region18: #{tpu_custom_call.1} parent=15 // pred_check_branch
          %86 = sbr.rel (%p84) target = $region20
        $region19: #{tpu_custom_call.1} parent=15 // pred_region
          %s87 = sand.u32 %s23, 1
          %s88 = scalar_lea.sflag [#allocation3], %s87
          %s89 = sand.u32 %s23, 1
          %s90 = smul.addr %s89, 576
          %s91 = scalar_lea.vmem [#allocation2], %s90
          %s92 = smul.u32 24, %s13
          %s94 = ssub.s32 9216, 9216
          %95 = vsyncadd %s88, %s94
          %s96 = smul.addr %s92, 3
          %s97 = smul.addr %s96, 128
          %s98 = scalar_lea.hbm %s0, %s97
          %s99 = sshll.u32 %s91, 4
          %s100 = int_to_ptr.vmem [resolvable:$true] %s99
          %105 = dma.hbm_to_vmem [thread:$0]  %s98, 9216, %s100, %s88, 384, 384, 24
        $region20: #{tpu_custom_call.1} parent=15 // pred_fallthru
          _
      $region16: #{tpu_custom_call.1} parent=5 // pred_fallthru
        _
      %p106 = scmp.le.s32.totalorder 1, %s13
      %p107 = scmp.lt.s32.totalorder %s13, 9
      %p108 = pnand %p106, %p107
      %p109 = pneg %p108
      // Predicated region
      $region21: #{tpu_custom_call.1} parent=5 // pred_check
        _
      $region22: #{tpu_custom_call.1} parent=5 // pred_check_branch
        %111 = sbr.rel (%p108) target = $region24
      $region23: #{tpu_custom_call.1} parent=5 // pred_region
        %s112 = ssub.s32 %s13, 1
        %s113 = sand.u32 %s26, 1
        %s114 = scalar_lea.sflag [#allocation3], %s113
        %s115 = sand.u32 %s26, 1
        %s116 = smul.addr %s115, 576
        %s117 = scalar_lea.vmem [#allocation2], %s116
        // Predicated region
        $region25: #{tpu_custom_call.1} parent=23 // pred_check
          %p118 = pneg %p39
        $region26: #{tpu_custom_call.1} parent=23 // pred_check_branch
          %120 = sbr.rel (%p118) target = $region28
        $region27: #{tpu_custom_call.1} parent=23 // pred_region
          %121 = dma.done %s114, 9216
        $region28: #{tpu_custom_call.1} parent=23 // pred_fallthru
          _
        %s122 = sand.u32 %s26, 1
        %s123 = scalar_lea.sflag [#allocation3], %s122
        %s124 = sand.u32 %s26, 1
        %s125 = smul.addr %s124, 576
        %s126 = scalar_lea.vmem [#allocation2], %s125
        %p127 = pneg %p39
        %p128 = pneg %p36
        %p129 = pneg %p65
        %p130 = pneg %p62
        %s131 = sand.u32 %s52, 1
        %s132 = scalar_lea.sflag [#allocation4], %s131
        %s133 = sand.u32 %s52, 1
        %s134 = smul.addr %s133, 576
        %s135 = scalar_lea.vmem [#allocation5], %s134
        %s136 = smul.u32 24, %s18
        %s137 = smul.u32 24, %s18
        %v138 = vld [vmem:[%s117] sm:$0xff]
        %v139 = vld [vmem:[%s117 + $0x8] sm:$0xff]
        %v140 = vld [vmem:[%s117 + $0x10] sm:$0xff]
        %v141 = vld [vmem:[%s117 + $0x18] sm:$0xff]
        %v142 = vld [vmem:[%s117 + $0x20] sm:$0xff]
        %v143 = vld [vmem:[%s117 + $0x28] sm:$0xff]
        %v144 = vld [vmem:[%s117 + $0x30] sm:$0xff]
        %v145 = vld [vmem:[%s117 + $0x38] sm:$0xff]
        %v146 = vld [vmem:[%s117 + $0x40] sm:$0xff]
        %v147 = vld [vmem:[%s117 + $0x48] sm:$0xff]
        %v148 = vld [vmem:[%s117 + $0x50] sm:$0xff]
        %v149 = vld [vmem:[%s117 + $0x58] sm:$0xff]
        %v150 = vld [vmem:[%s117 + $0x60] sm:$0xff]
        %v151 = vld [vmem:[%s117 + $0x68] sm:$0xff]
        %v152 = vld [vmem:[%s117 + $0x70] sm:$0xff]
        %v153 = vld [vmem:[%s117 + $0x78] sm:$0xff]
        %v154 = vld [vmem:[%s117 + $0x80] sm:$0xff]
        %v155 = vld [vmem:[%s117 + $0x88] sm:$0xff]
        %v156 = vld [vmem:[%s117 + $0x90] sm:$0xff]
        %v157 = vld [vmem:[%s117 + $0x98] sm:$0xff]
        %v158 = vld [vmem:[%s117 + $0xa0] sm:$0xff]
        %v159 = vld [vmem:[%s117 + $0xa8] sm:$0xff]
        %v160 = vld [vmem:[%s117 + $0xb0] sm:$0xff]
        %v161 = vld [vmem:[%s117 + $0xb8] sm:$0xff]
        %v162 = vld [vmem:[%s117 + $0xc0] sm:$0xff]
        %v163 = vld [vmem:[%s117 + $0xc8] sm:$0xff]
        %v164 = vld [vmem:[%s117 + $0xd0] sm:$0xff]
        %v165 = vld [vmem:[%s117 + $0xd8] sm:$0xff]
        %v166 = vld [vmem:[%s117 + $0xe0] sm:$0xff]
        %v167 = vld [vmem:[%s117 + $0xe8] sm:$0xff]
        %v168 = vld [vmem:[%s117 + $0xf0] sm:$0xff]
        %v169 = vld [vmem:[%s117 + $0xf8] sm:$0xff]
        %v170 = vld [vmem:[%s117 + $0x100] sm:$0xff]
        %v171 = vld [vmem:[%s117 + $0x108] sm:$0xff]
        %v172 = vld [vmem:[%s117 + $0x110] sm:$0xff]
        %v173 = vld [vmem:[%s117 + $0x118] sm:$0xff]
        %v174 = vld [vmem:[%s117 + $0x120] sm:$0xff]
        %v175 = vld [vmem:[%s117 + $0x128] sm:$0xff]
        %v176 = vld [vmem:[%s117 + $0x130] sm:$0xff]
        %v177 = vld [vmem:[%s117 + $0x138] sm:$0xff]
        %v178 = vld [vmem:[%s117 + $0x140] sm:$0xff]
        %v179 = vld [vmem:[%s117 + $0x148] sm:$0xff]
        %v180 = vld [vmem:[%s117 + $0x150] sm:$0xff]
        %v181 = vld [vmem:[%s117 + $0x158] sm:$0xff]
        %v182 = vld [vmem:[%s117 + $0x160] sm:$0xff]
        %v183 = vld [vmem:[%s117 + $0x168] sm:$0xff]
        %v184 = vld [vmem:[%s117 + $0x170] sm:$0xff]
        %v185 = vld [vmem:[%s117 + $0x178] sm:$0xff]
        %v186 = vld [vmem:[%s117 + $0x180] sm:$0xff]
        %v187 = vld [vmem:[%s117 + $0x188] sm:$0xff]
        %v188 = vld [vmem:[%s117 + $0x190] sm:$0xff]
        %v189 = vld [vmem:[%s117 + $0x198] sm:$0xff]
        %v190 = vld [vmem:[%s117 + $0x1a0] sm:$0xff]
        %v191 = vld [vmem:[%s117 + $0x1a8] sm:$0xff]
        %v192 = vld [vmem:[%s117 + $0x1b0] sm:$0xff]
        %v193 = vld [vmem:[%s117 + $0x1b8] sm:$0xff]
        %v194 = vld [vmem:[%s117 + $0x1c0] sm:$0xff]
        %v195 = vld [vmem:[%s117 + $0x1c8] sm:$0xff]
        %v196 = vld [vmem:[%s117 + $0x1d0] sm:$0xff]
        %v197 = vld [vmem:[%s117 + $0x1d8] sm:$0xff]
        %v198 = vld [vmem:[%s117 + $0x1e0] sm:$0xff]
        %v199 = vld [vmem:[%s117 + $0x1e8] sm:$0xff]
        %v200 = vld [vmem:[%s117 + $0x1f0] sm:$0xff]
        %v201 = vld [vmem:[%s117 + $0x1f8] sm:$0xff]
        %v202 = vld [vmem:[%s117 + $0x200] sm:$0xff]
        %v203 = vld [vmem:[%s117 + $0x208] sm:$0xff]
        %v204 = vld [vmem:[%s117 + $0x210] sm:$0xff]
        %v205 = vld [vmem:[%s117 + $0x218] sm:$0xff]
        %v206 = vld [vmem:[%s117 + $0x220] sm:$0xff]
        %v207 = vld [vmem:[%s117 + $0x228] sm:$0xff]
        %v208 = vld [vmem:[%s117 + $0x230] sm:$0xff]
        %v209 = vld [vmem:[%s117 + $0x238] sm:$0xff]
        %v210 = vmax.f32 %v138, %v139
        %v211 = vmax.f32 %v210, %v140
        %212 = vmax.xlane.f32.xlu0 %v211
        %v213 = vpop.xlane.xlu0 %212
        %v214 = vmax.f32 %v141, %v142
        %v215 = vmax.f32 %v214, %v143
        %216 = vmax.xlane.f32.xlu0 %v215
        %v217 = vpop.xlane.xlu0 %216
        %v218 = vmax.f32 %v144, %v145
        %v219 = vmax.f32 %v218, %v146
        %220 = vmax.xlane.f32.xlu0 %v219
        %v221 = vpop.xlane.xlu0 %220
        %v222 = vmax.f32 %v147, %v148
        %v223 = vmax.f32 %v222, %v149
        %224 = vmax.xlane.f32.xlu0 %v223
        %v225 = vpop.xlane.xlu0 %224
        %v226 = vmax.f32 %v150, %v151
        %v227 = vmax.f32 %v226, %v152
        %228 = vmax.xlane.f32.xlu0 %v227
        %v229 = vpop.xlane.xlu0 %228
        %v230 = vmax.f32 %v153, %v154
        %v231 = vmax.f32 %v230, %v155
        %232 = vmax.xlane.f32.xlu0 %v231
        %v233 = vpop.xlane.xlu0 %232
        %v234 = vmax.f32 %v156, %v157
        %v235 = vmax.f32 %v234, %v158
        %236 = vmax.xlane.f32.xlu0 %v235
        %v237 = vpop.xlane.xlu0 %236
        %v238 = vmax.f32 %v159, %v160
        %v239 = vmax.f32 %v238, %v161
        %240 = vmax.xlane.f32.xlu0 %v239
        %v241 = vpop.xlane.xlu0 %240
        %v242 = vmax.f32 %v162, %v163
        %v243 = vmax.f32 %v242, %v164
        %244 = vmax.xlane.f32.xlu0 %v243
        %v245 = vpop.xlane.xlu0 %244
        %v246 = vmax.f32 %v165, %v166
        %v247 = vmax.f32 %v246, %v167
        %248 = vmax.xlane.f32.xlu0 %v247
        %v249 = vpop.xlane.xlu0 %248
        %v250 = vmax.f32 %v168, %v169
        %v251 = vmax.f32 %v250, %v170
        %252 = vmax.xlane.f32.xlu0 %v251
        %v253 = vpop.xlane.xlu0 %252
        %v254 = vmax.f32 %v171, %v172
        %v255 = vmax.f32 %v254, %v173
        %256 = vmax.xlane.f32.xlu0 %v255
        %v257 = vpop.xlane.xlu0 %256
        %v258 = vmax.f32 %v174, %v175
        %v259 = vmax.f32 %v258, %v176
        %260 = vmax.xlane.f32.xlu0 %v259
        %v261 = vpop.xlane.xlu0 %260
        %v262 = vmax.f32 %v177, %v178
        %v263 = vmax.f32 %v262, %v179
        %264 = vmax.xlane.f32.xlu0 %v263
        %v265 = vpop.xlane.xlu0 %264
        %v266 = vmax.f32 %v180, %v181
        %v267 = vmax.f32 %v266, %v182
        %268 = vmax.xlane.f32.xlu0 %v267
        %v269 = vpop.xlane.xlu0 %268
        %v270 = vmax.f32 %v183, %v184
        %v271 = vmax.f32 %v270, %v185
        %272 = vmax.xlane.f32.xlu0 %v271
        %v273 = vpop.xlane.xlu0 %272
        %v274 = vmax.f32 %v186, %v187
        %v275 = vmax.f32 %v274, %v188
        %276 = vmax.xlane.f32.xlu0 %v275
        %v277 = vpop.xlane.xlu0 %276
        %v278 = vmax.f32 %v189, %v190
        %v279 = vmax.f32 %v278, %v191
        %280 = vmax.xlane.f32.xlu0 %v279
        %v281 = vpop.xlane.xlu0 %280
        %v282 = vmax.f32 %v192, %v193
        %v283 = vmax.f32 %v282, %v194
        %284 = vmax.xlane.f32.xlu0 %v283
        %v285 = vpop.xlane.xlu0 %284
        %v286 = vmax.f32 %v195, %v196
        %v287 = vmax.f32 %v286, %v197
        %288 = vmax.xlane.f32.xlu0 %v287
        %v289 = vpop.xlane.xlu0 %288
        %v290 = vmax.f32 %v198, %v199
        %v291 = vmax.f32 %v290, %v200
        %292 = vmax.xlane.f32.xlu0 %v291
        %v293 = vpop.xlane.xlu0 %292
        %v294 = vmax.f32 %v201, %v202
        %v295 = vmax.f32 %v294, %v203
        %296 = vmax.xlane.f32.xlu0 %v295
        %v297 = vpop.xlane.xlu0 %296
        %v298 = vmax.f32 %v204, %v205
        %v299 = vmax.f32 %v298, %v206
        %300 = vmax.xlane.f32.xlu0 %v299
        %v301 = vpop.xlane.xlu0 %300
        %v302 = vmax.f32 %v207, %v208
        %v303 = vmax.f32 %v302, %v209
        %304 = vmax.xlane.f32.xlu0 %v303
        %v305 = vpop.xlane.xlu0 %304
        %v306 = vsub.f32 %v138, %v213
        %v307 = vsub.f32 %v139, %v213
        %v308 = vsub.f32 %v140, %v213
        %v309 = vsub.f32 %v141, %v217
        %v310 = vsub.f32 %v142, %v217
        %v311 = vsub.f32 %v143, %v217
        %v312 = vsub.f32 %v144, %v221
        %v313 = vsub.f32 %v145, %v221
        %v314 = vsub.f32 %v146, %v221
        %v315 = vsub.f32 %v147, %v225
        %v316 = vsub.f32 %v148, %v225
        %v317 = vsub.f32 %v149, %v225
        %v318 = vsub.f32 %v150, %v229
        %v319 = vsub.f32 %v151, %v229
        %v320 = vsub.f32 %v152, %v229
        %v321 = vsub.f32 %v153, %v233
        %v322 = vsub.f32 %v154, %v233
        %v323 = vsub.f32 %v155, %v233
        %v324 = vsub.f32 %v156, %v237
        %v325 = vsub.f32 %v157, %v237
        %v326 = vsub.f32 %v158, %v237
        %v327 = vsub.f32 %v159, %v241
        %v328 = vsub.f32 %v160, %v241
        %v329 = vsub.f32 %v161, %v241
        %v330 = vsub.f32 %v162, %v245
        %v331 = vsub.f32 %v163, %v245
        %v332 = vsub.f32 %v164, %v245
        %v333 = vsub.f32 %v165, %v249
        %v334 = vsub.f32 %v166, %v249
        %v335 = vsub.f32 %v167, %v249
        %v336 = vsub.f32 %v168, %v253
        %v337 = vsub.f32 %v169, %v253
        %v338 = vsub.f32 %v170, %v253
        %v339 = vsub.f32 %v171, %v257
        %v340 = vsub.f32 %v172, %v257
        %v341 = vsub.f32 %v173, %v257
        %v342 = vsub.f32 %v174, %v261
        %v343 = vsub.f32 %v175, %v261
        %v344 = vsub.f32 %v176, %v261
        %v345 = vsub.f32 %v177, %v265
        %v346 = vsub.f32 %v178, %v265
        %v347 = vsub.f32 %v179, %v265
        %v348 = vsub.f32 %v180, %v269
        %v349 = vsub.f32 %v181, %v269
        %v350 = vsub.f32 %v182, %v269
        %v351 = vsub.f32 %v183, %v273
        %v352 = vsub.f32 %v184, %v273
        %v353 = vsub.f32 %v185, %v273
        %v354 = vsub.f32 %v186, %v277
        %v355 = vsub.f32 %v187, %v277
        %v356 = vsub.f32 %v188, %v277
        %v357 = vsub.f32 %v189, %v281
        %v358 = vsub.f32 %v190, %v281
        %v359 = vsub.f32 %v191, %v281
        %v360 = vsub.f32 %v192, %v285
        %v361 = vsub.f32 %v193, %v285
        %v362 = vsub.f32 %v194, %v285
        %v363 = vsub.f32 %v195, %v289
        %v364 = vsub.f32 %v196, %v289
        %v365 = vsub.f32 %v197, %v289
        %v366 = vsub.f32 %v198, %v293
        %v367 = vsub.f32 %v199, %v293
        %v368 = vsub.f32 %v200, %v293
        %v369 = vsub.f32 %v201, %v297
        %v370 = vsub.f32 %v202, %v297
        %v371 = vsub.f32 %v203, %v297
        %v372 = vsub.f32 %v204, %v301
        %v373 = vsub.f32 %v205, %v301
        %v374 = vsub.f32 %v206, %v301
        %v375 = vsub.f32 %v207, %v305
        %v376 = vsub.f32 %v208, %v305
        %v377 = vsub.f32 %v209, %v305
        %v378 = vmul.f32 %v306, 1.442695
        %v379 = vpow.pop %v378
        %v380 = vmul.f32 %v307, 1.442695
        %v381 = vpow.pop %v380
        %v382 = vmul.f32 %v308, 1.442695
        %v383 = vpow.pop %v382
        %v384 = vmul.f32 %v309, 1.442695
        %v385 = vpow.pop %v384
        %v386 = vmul.f32 %v310, 1.442695
        %v387 = vpow.pop %v386
        %v388 = vmul.f32 %v311, 1.442695
        %v389 = vpow.pop %v388
        %v390 = vmul.f32 %v312, 1.442695
        %v391 = vpow.pop %v390
        %v392 = vmul.f32 %v313, 1.442695
        %v393 = vpow.pop %v392
        %v394 = vmul.f32 %v314, 1.442695
        %v395 = vpow.pop %v394
        %v396 = vmul.f32 %v315, 1.442695
        %v397 = vpow.pop %v396
        %v398 = vmul.f32 %v316, 1.442695
        %v399 = vpow.pop %v398
        %v400 = vmul.f32 %v317, 1.442695
        %v401 = vpow.pop %v400
        %v402 = vmul.f32 %v318, 1.442695
        %v403 = vpow.pop %v402
        %v404 = vmul.f32 %v319, 1.442695
        %v405 = vpow.pop %v404
        %v406 = vmul.f32 %v320, 1.442695
        %v407 = vpow.pop %v406
        %v408 = vmul.f32 %v321, 1.442695
        %v409 = vpow.pop %v408
        %v410 = vmul.f32 %v322, 1.442695
        %v411 = vpow.pop %v410
        %v412 = vmul.f32 %v323, 1.442695
        %v413 = vpow.pop %v412
        %v414 = vmul.f32 %v324, 1.442695
        %v415 = vpow.pop %v414
        %v416 = vmul.f32 %v325, 1.442695
        %v417 = vpow.pop %v416
        %v418 = vmul.f32 %v326, 1.442695
        %v419 = vpow.pop %v418
        %v420 = vmul.f32 %v327, 1.442695
        %v421 = vpow.pop %v420
        %v422 = vmul.f32 %v328, 1.442695
        %v423 = vpow.pop %v422
        %v424 = vmul.f32 %v329, 1.442695
        %v425 = vpow.pop %v424
        %v426 = vmul.f32 %v330, 1.442695
        %v427 = vpow.pop %v426
        %v428 = vmul.f32 %v331, 1.442695
        %v429 = vpow.pop %v428
        %v430 = vmul.f32 %v332, 1.442695
        %v431 = vpow.pop %v430
        %v432 = vmul.f32 %v333, 1.442695
        %v433 = vpow.pop %v432
        %v434 = vmul.f32 %v334, 1.442695
        %v435 = vpow.pop %v434
        %v436 = vmul.f32 %v335, 1.442695
        %v437 = vpow.pop %v436
        %v438 = vmul.f32 %v336, 1.442695
        %v439 = vpow.pop %v438
        %v440 = vmul.f32 %v337, 1.442695
        %v441 = vpow.pop %v440
        %v442 = vmul.f32 %v338, 1.442695
        %v443 = vpow.pop %v442
        %v444 = vmul.f32 %v339, 1.442695
        %v445 = vpow.pop %v444
        %v446 = vmul.f32 %v340, 1.442695
        %v447 = vpow.pop %v446
        %v448 = vmul.f32 %v341, 1.442695
        %v449 = vpow.pop %v448
        %v450 = vmul.f32 %v342, 1.442695
        %v451 = vpow.pop %v450
        %v452 = vmul.f32 %v343, 1.442695
        %v453 = vpow.pop %v452
        %v454 = vmul.f32 %v344, 1.442695
        %v455 = vpow.pop %v454
        %v456 = vmul.f32 %v345, 1.442695
        %v457 = vpow.pop %v456
        %v458 = vmul.f32 %v346, 1.442695
        %v459 = vpow.pop %v458
        %v460 = vmul.f32 %v347, 1.442695
        %v461 = vpow.pop %v460
        %v462 = vmul.f32 %v348, 1.442695
        %v463 = vpow.pop %v462
        %v464 = vmul.f32 %v349, 1.442695
        %v465 = vpow.pop %v464
        %v466 = vmul.f32 %v350, 1.442695
        %v467 = vpow.pop %v466
        %v468 = vmul.f32 %v351, 1.442695
        %v469 = vpow.pop %v468
        %v470 = vmul.f32 %v352, 1.442695
        %v471 = vpow.pop %v470
        %v472 = vmul.f32 %v353, 1.442695
        %v473 = vpow.pop %v472
        %v474 = vmul.f32 %v354, 1.442695
        %v475 = vpow.pop %v474
        %v476 = vmul.f32 %v355, 1.442695
        %v477 = vpow.pop %v476
        %v478 = vmul.f32 %v356, 1.442695
        %v479 = vpow.pop %v478
        %v480 = vmul.f32 %v357, 1.442695
        %v481 = vpow.pop %v480
        %v482 = vmul.f32 %v358, 1.442695
        %v483 = vpow.pop %v482
        %v484 = vmul.f32 %v359, 1.442695
        %v485 = vpow.pop %v484
        %v486 = vmul.f32 %v360, 1.442695
        %v487 = vpow.pop %v486
        %v488 = vmul.f32 %v361, 1.442695
        %v489 = vpow.pop %v488
        %v490 = vmul.f32 %v362, 1.442695
        %v491 = vpow.pop %v490
        %v492 = vmul.f32 %v363, 1.442695
        %v493 = vpow.pop %v492
        %v494 = vmul.f32 %v364, 1.442695
        %v495 = vpow.pop %v494
        %v496 = vmul.f32 %v365, 1.442695
        %v497 = vpow.pop %v496
        %v498 = vmul.f32 %v366, 1.442695
        %v499 = vpow.pop %v498
        %v500 = vmul.f32 %v367, 1.442695
        %v501 = vpow.pop %v500
        %v502 = vmul.f32 %v368, 1.442695
        %v503 = vpow.pop %v502
        %v504 = vmul.f32 %v369, 1.442695
        %v505 = vpow.pop %v504
        %v506 = vmul.f32 %v370, 1.442695
        %v507 = vpow.pop %v506
        %v508 = vmul.f32 %v371, 1.442695
        %v509 = vpow.pop %v508
        %v510 = vmul.f32 %v372, 1.442695
        %v511 = vpow.pop %v510
        %v512 = vmul.f32 %v373, 1.442695
        %v513 = vpow.pop %v512
        %v514 = vmul.f32 %v374, 1.442695
        %v515 = vpow.pop %v514
        %v516 = vmul.f32 %v375, 1.442695
        %v517 = vpow.pop %v516
        %v518 = vmul.f32 %v376, 1.442695
        %v519 = vpow.pop %v518
        %v520 = vmul.f32 %v377, 1.442695
        %v521 = vpow.pop %v520
        %v522 = vadd.f32 %v379, %v381
        %v523 = vadd.f32 %v522, %v383
        %524 = vadd.xlane.f32.xlu0 %v523
        %v525 = vpop.xlane.xlu0 %524
        %v526 = vadd.f32 %v385, %v387
        %v527 = vadd.f32 %v526, %v389
        %528 = vadd.xlane.f32.xlu0 %v527
        %v529 = vpop.xlane.xlu0 %528
        %v530 = vadd.f32 %v391, %v393
        %v531 = vadd.f32 %v530, %v395
        %532 = vadd.xlane.f32.xlu0 %v531
        %v533 = vpop.xlane.xlu0 %532
        %v534 = vadd.f32 %v397, %v399
        %v535 = vadd.f32 %v534, %v401
        %536 = vadd.xlane.f32.xlu0 %v535
        %v537 = vpop.xlane.xlu0 %536
        %v538 = vadd.f32 %v403, %v405
        %v539 = vadd.f32 %v538, %v407
        %540 = vadd.xlane.f32.xlu0 %v539
        %v541 = vpop.xlane.xlu0 %540
        %v542 = vadd.f32 %v409, %v411
        %v543 = vadd.f32 %v542, %v413
        %544 = vadd.xlane.f32.xlu0 %v543
        %v545 = vpop.xlane.xlu0 %544
        %v546 = vadd.f32 %v415, %v417
        %v547 = vadd.f32 %v546, %v419
        %548 = vadd.xlane.f32.xlu0 %v547
        %v549 = vpop.xlane.xlu0 %548
        %v550 = vadd.f32 %v421, %v423
        %v551 = vadd.f32 %v550, %v425
        %552 = vadd.xlane.f32.xlu0 %v551
        %v553 = vpop.xlane.xlu0 %552
        %v554 = vadd.f32 %v427, %v429
        %v555 = vadd.f32 %v554, %v431
        %556 = vadd.xlane.f32.xlu0 %v555
        %v557 = vpop.xlane.xlu0 %556
        %v558 = vadd.f32 %v433, %v435
        %v559 = vadd.f32 %v558, %v437
        %560 = vadd.xlane.f32.xlu0 %v559
        %v561 = vpop.xlane.xlu0 %560
        %v562 = vadd.f32 %v439, %v441
        %v563 = vadd.f32 %v562, %v443
        %564 = vadd.xlane.f32.xlu0 %v563
        %v565 = vpop.xlane.xlu0 %564
        %v566 = vadd.f32 %v445, %v447
        %v567 = vadd.f32 %v566, %v449
        %568 = vadd.xlane.f32.xlu0 %v567
        %v569 = vpop.xlane.xlu0 %568
        %v570 = vadd.f32 %v451, %v453
        %v571 = vadd.f32 %v570, %v455
        %572 = vadd.xlane.f32.xlu0 %v571
        %v573 = vpop.xlane.xlu0 %572
        %v574 = vadd.f32 %v457, %v459
        %v575 = vadd.f32 %v574, %v461
        %576 = vadd.xlane.f32.xlu0 %v575
        %v577 = vpop.xlane.xlu0 %576
        %v578 = vadd.f32 %v463, %v465
        %v579 = vadd.f32 %v578, %v467
        %580 = vadd.xlane.f32.xlu0 %v579
        %v581 = vpop.xlane.xlu0 %580
        %v582 = vadd.f32 %v469, %v471
        %v583 = vadd.f32 %v582, %v473
        %584 = vadd.xlane.f32.xlu0 %v583
        %v585 = vpop.xlane.xlu0 %584
        %v586 = vadd.f32 %v475, %v477
        %v587 = vadd.f32 %v586, %v479
        %588 = vadd.xlane.f32.xlu0 %v587
        %v589 = vpop.xlane.xlu0 %588
        %v590 = vadd.f32 %v481, %v483
        %v591 = vadd.f32 %v590, %v485
        %592 = vadd.xlane.f32.xlu0 %v591
        %v593 = vpop.xlane.xlu0 %592
        %v594 = vadd.f32 %v487, %v489
        %v595 = vadd.f32 %v594, %v491
        %596 = vadd.xlane.f32.xlu0 %v595
        %v597 = vpop.xlane.xlu0 %596
        %v598 = vadd.f32 %v493, %v495
        %v599 = vadd.f32 %v598, %v497
        %600 = vadd.xlane.f32.xlu0 %v599
        %v601 = vpop.xlane.xlu0 %600
        %v602 = vadd.f32 %v499, %v501
        %v603 = vadd.f32 %v602, %v503
        %604 = vadd.xlane.f32.xlu0 %v603
        %v605 = vpop.xlane.xlu0 %604
        %v606 = vadd.f32 %v505, %v507
        %v607 = vadd.f32 %v606, %v509
        %608 = vadd.xlane.f32.xlu0 %v607
        %v609 = vpop.xlane.xlu0 %608
        %v610 = vadd.f32 %v511, %v513
        %v611 = vadd.f32 %v610, %v515
        %612 = vadd.xlane.f32.xlu0 %v611
        %v613 = vpop.xlane.xlu0 %612
        %v614 = vadd.f32 %v517, %v519
        %v615 = vadd.f32 %v614, %v521
        %616 = vadd.xlane.f32.xlu0 %v615
        %v617 = vpop.xlane.xlu0 %616
        %v618 = vrcp.pop %v525
        %v619 = vrcp.pop %v529
        %v620 = vrcp.pop %v533
        %v621 = vrcp.pop %v537
        %v622 = vrcp.pop %v541
        %v623 = vrcp.pop %v545
        %v624 = vrcp.pop %v549
        %v625 = vrcp.pop %v553
        %v626 = vrcp.pop %v557
        %v627 = vrcp.pop %v561
        %v628 = vrcp.pop %v565
        %v629 = vrcp.pop %v569
        %v630 = vrcp.pop %v573
        %v631 = vrcp.pop %v577
        %v632 = vrcp.pop %v581
        %v633 = vrcp.pop %v585
        %v634 = vrcp.pop %v589
        %v635 = vrcp.pop %v593
        %v636 = vrcp.pop %v597
        %v637 = vrcp.pop %v601
        %v638 = vrcp.pop %v605
        %v639 = vrcp.pop %v609
        %v640 = vrcp.pop %v613
        %v641 = vrcp.pop %v617
        %v642 = vmul.f32 %v379, %v618
        %v643 = vmul.f32 %v381, %v618
        %v644 = vmul.f32 %v383, %v618
        %v645 = vmul.f32 %v385, %v619
        %v646 = vmul.f32 %v387, %v619
        %v647 = vmul.f32 %v389, %v619
        %v648 = vmul.f32 %v391, %v620
        %v649 = vmul.f32 %v393, %v620
        %v650 = vmul.f32 %v395, %v620
        %v651 = vmul.f32 %v397, %v621
        %v652 = vmul.f32 %v399, %v621
        %v653 = vmul.f32 %v401, %v621
        %v654 = vmul.f32 %v403, %v622
        %v655 = vmul.f32 %v405, %v622
        %v656 = vmul.f32 %v407, %v622
        %v657 = vmul.f32 %v409, %v623
        %v658 = vmul.f32 %v411, %v623
        %v659 = vmul.f32 %v413, %v623
        %v660 = vmul.f32 %v415, %v624
        %v661 = vmul.f32 %v417, %v624
        %v662 = vmul.f32 %v419, %v624
        %v663 = vmul.f32 %v421, %v625
        %v664 = vmul.f32 %v423, %v625
        %v665 = vmul.f32 %v425, %v625
        %v666 = vmul.f32 %v427, %v626
        %v667 = vmul.f32 %v429, %v626
        %v668 = vmul.f32 %v431, %v626
        %v669 = vmul.f32 %v433, %v627
        %v670 = vmul.f32 %v435, %v627
        %v671 = vmul.f32 %v437, %v627
        %v672 = vmul.f32 %v439, %v628
        %v673 = vmul.f32 %v441, %v628
        %v674 = vmul.f32 %v443, %v628
        %v675 = vmul.f32 %v445, %v629
        %v676 = vmul.f32 %v447, %v629
        %v677 = vmul.f32 %v449, %v629
        %v678 = vmul.f32 %v451, %v630
        %v679 = vmul.f32 %v453, %v630
        %v680 = vmul.f32 %v455, %v630
        %v681 = vmul.f32 %v457, %v631
        %v682 = vmul.f32 %v459, %v631
        %v683 = vmul.f32 %v461, %v631
        %v684 = vmul.f32 %v463, %v632
        %v685 = vmul.f32 %v465, %v632
        %v686 = vmul.f32 %v467, %v632
        %v687 = vmul.f32 %v469, %v633
        %v688 = vmul.f32 %v471, %v633
        %v689 = vmul.f32 %v473, %v633
        %v690 = vmul.f32 %v475, %v634
        %v691 = vmul.f32 %v477, %v634
        %v692 = vmul.f32 %v479, %v634
        %v693 = vmul.f32 %v481, %v635
        %v694 = vmul.f32 %v483, %v635
        %v695 = vmul.f32 %v485, %v635
        %v696 = vmul.f32 %v487, %v636
        %v697 = vmul.f32 %v489, %v636
        %v698 = vmul.f32 %v491, %v636
        %v699 = vmul.f32 %v493, %v637
        %v700 = vmul.f32 %v495, %v637
        %v701 = vmul.f32 %v497, %v637
        %v702 = vmul.f32 %v499, %v638
        %v703 = vmul.f32 %v501, %v638
        %v704 = vmul.f32 %v503, %v638
        %v705 = vmul.f32 %v505, %v639
        %v706 = vmul.f32 %v507, %v639
        %v707 = vmul.f32 %v509, %v639
        %v708 = vmul.f32 %v511, %v640
        %v709 = vmul.f32 %v513, %v640
        %v710 = vmul.f32 %v515, %v640
        %v711 = vmul.f32 %v517, %v641
        %v712 = vmul.f32 %v519, %v641
        %v713 = vmul.f32 %v521, %v641
        %714 = vst [vmem:[%s135] sm:$0xff] %v642
        %715 = vst [vmem:[%s135 + $0x8] sm:$0xff] %v643
        %716 = vst [vmem:[%s135 + $0x10] sm:$0xff] %v644
        %717 = vst [vmem:[%s135 + $0x18] sm:$0xff] %v645
        %718 = vst [vmem:[%s135 + $0x20] sm:$0xff] %v646
        %719 = vst [vmem:[%s135 + $0x28] sm:$0xff] %v647
        %720 = vst [vmem:[%s135 + $0x30] sm:$0xff] %v648
        %721 = vst [vmem:[%s135 + $0x38] sm:$0xff] %v649
        %722 = vst [vmem:[%s135 + $0x40] sm:$0xff] %v650
        %723 = vst [vmem:[%s135 + $0x48] sm:$0xff] %v651
        %724 = vst [vmem:[%s135 + $0x50] sm:$0xff] %v652
        %725 = vst [vmem:[%s135 + $0x58] sm:$0xff] %v653
        %726 = vst [vmem:[%s135 + $0x60] sm:$0xff] %v654
        %727 = vst [vmem:[%s135 + $0x68] sm:$0xff] %v655
        %728 = vst [vmem:[%s135 + $0x70] sm:$0xff] %v656
        %729 = vst [vmem:[%s135 + $0x78] sm:$0xff] %v657
        %730 = vst [vmem:[%s135 + $0x80] sm:$0xff] %v658
        %731 = vst [vmem:[%s135 + $0x88] sm:$0xff] %v659
        %732 = vst [vmem:[%s135 + $0x90] sm:$0xff] %v660
        %733 = vst [vmem:[%s135 + $0x98] sm:$0xff] %v661
        %734 = vst [vmem:[%s135 + $0xa0] sm:$0xff] %v662
        %735 = vst [vmem:[%s135 + $0xa8] sm:$0xff] %v663
        %736 = vst [vmem:[%s135 + $0xb0] sm:$0xff] %v664
        %737 = vst [vmem:[%s135 + $0xb8] sm:$0xff] %v665
        %738 = vst [vmem:[%s135 + $0xc0] sm:$0xff] %v666
        %739 = vst [vmem:[%s135 + $0xc8] sm:$0xff] %v667
        %740 = vst [vmem:[%s135 + $0xd0] sm:$0xff] %v668
        %741 = vst [vmem:[%s135 + $0xd8] sm:$0xff] %v669
        %742 = vst [vmem:[%s135 + $0xe0] sm:$0xff] %v670
        %743 = vst [vmem:[%s135 + $0xe8] sm:$0xff] %v671
        %744 = vst [vmem:[%s135 + $0xf0] sm:$0xff] %v672
        %745 = vst [vmem:[%s135 + $0xf8] sm:$0xff] %v673
        %746 = vst [vmem:[%s135 + $0x100] sm:$0xff] %v674
        %747 = vst [vmem:[%s135 + $0x108] sm:$0xff] %v675
        %748 = vst [vmem:[%s135 + $0x110] sm:$0xff] %v676
        %749 = vst [vmem:[%s135 + $0x118] sm:$0xff] %v677
        %750 = vst [vmem:[%s135 + $0x120] sm:$0xff] %v678
        %751 = vst [vmem:[%s135 + $0x128] sm:$0xff] %v679
        %752 = vst [vmem:[%s135 + $0x130] sm:$0xff] %v680
        %753 = vst [vmem:[%s135 + $0x138] sm:$0xff] %v681
        %754 = vst [vmem:[%s135 + $0x140] sm:$0xff] %v682
        %755 = vst [vmem:[%s135 + $0x148] sm:$0xff] %v683
        %756 = vst [vmem:[%s135 + $0x150] sm:$0xff] %v684
        %757 = vst [vmem:[%s135 + $0x158] sm:$0xff] %v685
        %758 = vst [vmem:[%s135 + $0x160] sm:$0xff] %v686
        %759 = vst [vmem:[%s135 + $0x168] sm:$0xff] %v687
        %760 = vst [vmem:[%s135 + $0x170] sm:$0xff] %v688
        %761 = vst [vmem:[%s135 + $0x178] sm:$0xff] %v689
        %762 = vst [vmem:[%s135 + $0x180] sm:$0xff] %v690
        %763 = vst [vmem:[%s135 + $0x188] sm:$0xff] %v691
        %764 = vst [vmem:[%s135 + $0x190] sm:$0xff] %v692
        %765 = vst [vmem:[%s135 + $0x198] sm:$0xff] %v693
        %766 = vst [vmem:[%s135 + $0x1a0] sm:$0xff] %v694
        %767 = vst [vmem:[%s135 + $0x1a8] sm:$0xff] %v695
        %768 = vst [vmem:[%s135 + $0x1b0] sm:$0xff] %v696
        %769 = vst [vmem:[%s135 + $0x1b8] sm:$0xff] %v697
        %770 = vst [vmem:[%s135 + $0x1c0] sm:$0xff] %v698
        %771 = vst [vmem:[%s135 + $0x1c8] sm:$0xff] %v699
        %772 = vst [vmem:[%s135 + $0x1d0] sm:$0xff] %v700
        %773 = vst [vmem:[%s135 + $0x1d8] sm:$0xff] %v701
        %774 = vst [vmem:[%s135 + $0x1e0] sm:$0xff] %v702
        %775 = vst [vmem:[%s135 + $0x1e8] sm:$0xff] %v703
        %776 = vst [vmem:[%s135 + $0x1f0] sm:$0xff] %v704
        %777 = vst [vmem:[%s135 + $0x1f8] sm:$0xff] %v705
        %778 = vst [vmem:[%s135 + $0x200] sm:$0xff] %v706
        %779 = vst [vmem:[%s135 + $0x208] sm:$0xff] %v707
        %780 = vst [vmem:[%s135 + $0x210] sm:$0xff] %v708
        %781 = vst [vmem:[%s135 + $0x218] sm:$0xff] %v709
        %782 = vst [vmem:[%s135 + $0x220] sm:$0xff] %v710
        %783 = vst [vmem:[%s135 + $0x228] sm:$0xff] %v711
        %784 = vst [vmem:[%s135 + $0x230] sm:$0xff] %v712
        %785 = vst [vmem:[%s135 + $0x238] sm:$0xff] %v713
        %s786 = sand.u32 %s52, 1
        %s787 = scalar_lea.sflag [#allocation4], %s786
        %s788 = sand.u32 %s52, 1
        %s789 = smul.addr %s788, 576
        %s790 = scalar_lea.vmem [#allocation5], %s789
        // Predicated region
        $region29: #{tpu_custom_call.1} parent=23 // pred_check
          %p791 = pneg %p62
        $region30: #{tpu_custom_call.1} parent=23 // pred_check_branch
          %793 = sbr.rel (%p791) target = $region32
        $region31: #{tpu_custom_call.1} parent=23 // pred_region
          %s794 = smul.u32 24, %s18
          %s796 = ssub.s32 9216, 9216
          %797 = vsyncadd %s787, %s796
          %s798 = smul.addr %s794, 3
          %s799 = smul.addr %s798, 128
          %s800 = scalar_lea.hbm %s1, %s799
          %s801 = sshll.u32 %s790, 4
          %s802 = int_to_ptr.vmem [resolvable:$true] %s801
          %807 = dma.vmem_to_hbm [thread:$0]  %s802, 9216, %s800, %s787, 384, 384, 24
        $region32: #{tpu_custom_call.1} parent=23 // pred_fallthru
          _
      $region24: #{tpu_custom_call.1} parent=5 // pred_fallthru
        _
      %p808 = scmp.le.s32.totalorder 2, %s13
      // Predicated region
      $region33: #{tpu_custom_call.1} parent=5 // pred_check
        %p809 = pneg %p808
      $region34: #{tpu_custom_call.1} parent=5 // pred_check_branch
        %811 = sbr.rel (%p809) target = $region36
      $region35: #{tpu_custom_call.1} parent=5 // pred_region
        %s812 = ssub.s32 %s13, 2
        // Predicated region
        $region37: #{tpu_custom_call.1} parent=35 // pred_check
          %p813 = pneg %p68
        $region38: #{tpu_custom_call.1} parent=35 // pred_check_branch
          %815 = sbr.rel (%p813) target = $region40
        $region39: #{tpu_custom_call.1} parent=35 // pred_region
          %s816 = sand.u32 %s53, 1
          %s817 = scalar_lea.sflag [#allocation4], %s816
          %s818 = sand.u32 %s53, 1
          %s819 = smul.addr %s818, 576
          %s820 = scalar_lea.vmem [#allocation5], %s819
          %821 = dma.done %s817, 9216
        $region40: #{tpu_custom_call.1} parent=35 // pred_fallthru
          _
      $region36: #{tpu_custom_call.1} parent=5 // pred_fallthru
        _
    $region6: #{tpu_custom_call.1} parent=1 // loop_footer
      %s17 = sadd.s32 1, %s13
    $region7: #{tpu_custom_call.1} parent=1 // loop_footer_branch
      %12 = sbr.rel target = $region3
    $region8: #{tpu_custom_call.1} parent=1 // loop_exit
      _
    %822 = vsyncpa [#allocation3], 1
    %s823 = scalar_lea.sflag [#allocation3], 1
    %824 = vsyncpa %s823, 1
    %825 = vsyncpa [#allocation4], 1
    %s826 = scalar_lea.sflag [#allocation4], 1
    %827 = vsyncpa %s826, 1

</llo_original>
